<compile_context>
chip_gen: v5e
topology: v5e:2x2
jax: 0.10.0
libtpu: 0.0.40
codegen_flags: <defaults>
</compile_context>

<pallas_src>
import functools

import jax
import jax.numpy as jnp
import numpy as np
from jax import lax
from jax.experimental import pallas as pl
from jax.experimental.pallas import tpu as pltpu

_LANES = 128


def _round_up(n, m):
    return (n + m - 1) // m * m


def _pick_row_tile(H):
    # Biggest multiple-of-8 row tile that divides H and leaves >= 2 tiles
    # (so the spatial grid axis can be sharded across TensorCores on v7x).
    for th in (32, 16, 8):
        if H % th == 0 and H // th >= 2:
            return th
    return H


# --------------------------- kernels ---------------------------------------
def _stage1_kernel(x_ref, s1_ref, b1_ref, w1_ref, s2_ref, b2_ref, o_ref,
                   *, TH, W, C_in_pad, C_mid_pad, mxu_dtype):
    """BN1 -> ReLU -> conv1x1 (single MXU matmul) -> BN2 -> ReLU."""
    x = x_ref[0].astype(jnp.float32)                        # (TH, W, Cin_pad)
    a = jnp.maximum(x * s1_ref[0] + b1_ref[0], 0.0)         # f32 VPU
    a = a.reshape(TH * W, C_in_pad).astype(mxu_dtype)
    acc = jnp.dot(a, w1_ref[...],                           # (TH*W, Cmid_pad)
                  preferred_element_type=jnp.float32)
    y = jnp.maximum(acc * s2_ref[0] + b2_ref[0], 0.0)       # f32 epilogue
    o_ref[0] = y.reshape(TH, W, C_mid_pad).astype(o_ref.dtype)


def _stage2_kernel(xp_ref, w2_ref, o_ref,
                   *, TH, W, C_mid_pad, C_out_pad, mxu_dtype):
    """3x3 / stride 1 / pad 1 conv via im2col -> one MXU matmul per tile.

    xp_ref holds the full zero-haloed activated bottleneck for one batch
    element (resident in VMEM across the inner row-tile axis); each grid step
    computes TH output rows from TH+2 input rows.
    """
    t = pl.program_id(1)
    r0 = pl.multiple_of(t * TH, TH)
    x = xp_ref[0, pl.ds(r0, TH + 2), :, :]                  # (TH+2, W+2, Cmid)
    taps = []
    for kh in range(3):
        for kw in range(3):
            taps.append(lax.slice(x, (kh, kw, 0),
                                  (kh + TH, kw + W, C_mid_pad)))
    patches = jnp.concatenate(taps, axis=-1)                # (TH, W, 9*Cmid)
    patches = patches.reshape(TH * W, 9 * C_mid_pad).astype(mxu_dtype)
    acc = jnp.dot(patches, w2_ref[...],                     # (TH*W, Cout_pad)
                  preferred_element_type=jnp.float32)
    o_ref[0] = acc.reshape(TH, W, C_out_pad).astype(o_ref.dtype)


# --------------------------- wrapper ----------------------------------------
def bottleneck_unit_forward(prev_features, w1_oihw, w2_oihw,
                            bn1_params, bn2_params, *,
                            eps=1e-5, p_dropout=0.0,
                            compute_dtype=jnp.bfloat16):
    """prev_features: tuple of NCHW arrays; weights in PyTorch OIHW layout."""
    x_nchw = jnp.concatenate(prev_features, axis=1)          # torch.cat(.., 1)
    B, C_in, H, W = x_nchw.shape
    C_mid = w1_oihw.shape[0]
    C_out = w2_oihw.shape[0]
    assert w1_oihw.shape == (C_mid, C_in, 1, 1)
    assert w2_oihw.shape == (C_out, C_mid, 3, 3)

    C_in_pad = _round_up(C_in, _LANES)
    C_mid_pad = _round_up(C_mid, _LANES)
    C_out_pad = _round_up(C_out, _LANES)
    TH = _pick_row_tile(H)
    T = H // TH
    out_dtype = x_nchw.dtype

    # NHWC, lane-padded channels, bf16 for the MXU (f32 accumulation in-kernel)
    x = jnp.transpose(x_nchw, (0, 2, 3, 1))
    x = jnp.pad(x, ((0, 0), (0, 0), (0, 0), (0, C_in_pad - C_in)))
    x = x.astype(compute_dtype)

    # Fold eval-mode BatchNorm into per-channel scale / bias (f32, lane-padded)
    def fold_bn(gamma, beta, mean, var, C, C_pad):
        scale = (gamma / jnp.sqrt(var + eps)).astype(jnp.float32)
        bias = (beta - mean * scale).astype(jnp.float32)
        scale = jnp.pad(scale, (0, C_pad - C)).reshape(1, C_pad)
        bias = jnp.pad(bias, (0, C_pad - C)).reshape(1, C_pad)
        return scale, bias

    s1, b1 = fold_bn(*bn1_params, C_in, C_in_pad)
    s2, b2 = fold_bn(*bn2_params, C_mid, C_mid_pad)

    # Lane-dense weight matrices (contraction and output dims padded to 128).
    w1 = jnp.transpose(w1_oihw[:, :, 0, 0], (1, 0))                 # (Cin, Cmid)
    w1 = jnp.pad(w1, ((0, C_in_pad - C_in), (0, C_mid_pad - C_mid)))
    w1 = w1.astype(compute_dtype)
    w2 = jnp.transpose(w2_oihw, (2, 3, 1, 0))                       # (3,3,Ci,Co)
    w2 = jnp.pad(w2, ((0, 0), (0, 0),
                      (0, C_mid_pad - C_mid), (0, C_out_pad - C_out)))
    w2 = w2.reshape(9 * C_mid_pad, C_out_pad).astype(compute_dtype)

    cparams = pltpu.CompilerParams(
        dimension_semantics=("parallel", "parallel"),
        vmem_limit_bytes=32 * 1024 * 1024)   # explicit, safe on v5e/v6e/v7x

    # ---- stage 1: BN1 -> ReLU -> conv1x1 -> BN2 -> ReLU --------------------
    k1 = functools.partial(_stage1_kernel, TH=TH, W=W,
                           C_in_pad=C_in_pad, C_mid_pad=C_mid_pad,
                           mxu_dtype=compute_dtype)
    bott = pl.pallas_call(
        k1,
        out_shape=jax.ShapeDtypeStruct((B, H, W, C_mid_pad), compute_dtype),
        grid=(B, T),
        in_specs=[
            pl.BlockSpec((1, TH, W, C_in_pad), lambda b, t: (b, t, 0, 0)),
            pl.BlockSpec((1, C_in_pad), lambda b, t: (0, 0)),
            pl.BlockSpec((1, C_in_pad), lambda b, t: (0, 0)),
            pl.BlockSpec((C_in_pad, C_mid_pad), lambda b, t: (0, 0)),
            pl.BlockSpec((1, C_mid_pad), lambda b, t: (0, 0)),
            pl.BlockSpec((1, C_mid_pad), lambda b, t: (0, 0)),
        ],
        out_specs=pl.BlockSpec((1, TH, W, C_mid_pad),
                               lambda b, t: (b, t, 0, 0)),
        compiler_params=cparams,
    )(x, s1, b1, w1, s2, b2)

    # Zero halo for the 3x3 / pad=1 conv.  The pad happens AFTER BN2+ReLU
    # (fused into stage 1), so zeros here match PyTorch's conv2 padding.
    bpad = jnp.pad(bott, ((0, 0), (1, 1), (1, 1), (0, 0)))

    # ---- stage 2: 3x3 conv (im2col, one big matmul per row tile) -----------
    k2 = functools.partial(_stage2_kernel, TH=TH, W=W,
                           C_mid_pad=C_mid_pad, C_out_pad=C_out_pad,
                           mxu_dtype=compute_dtype)
    out = pl.pallas_call(
        k2,
        out_shape=jax.ShapeDtypeStruct((B, H, W, C_out_pad), out_dtype),
        grid=(B, T),
        in_specs=[
            # full haloed bottleneck for one batch element; block index is
            # constant across the inner row-tile axis -> fetched once per b.
            pl.BlockSpec((1, H + 2, W + 2, C_mid_pad),
                         lambda b, t: (b, 0, 0, 0)),
            pl.BlockSpec((9 * C_mid_pad, C_out_pad), lambda b, t: (0, 0)),
        ],
        out_specs=pl.BlockSpec((1, TH, W, C_out_pad),
                               lambda b, t: (b, t, 0, 0)),
        compiler_params=cparams,
    )(bpad, w2)

    del p_dropout  # TODO(synk): training-mode dropout not implemented.

    out = out[:, :, :, :C_out]                 # strip lane padding
    return jnp.transpose(out, (0, 3, 1, 2))    # back to NCHW


# ---------------- pure-JAX reference for correctness check ------------------
def _ref_forward(prev_features, w1, w2, bn1, bn2, eps=1e-5):
    x = jnp.concatenate(prev_features, axis=1)
    g1, be1, m1, v1 = bn1
    y = (x - m1[None, :, None, None]) * (g1 / jnp.sqrt(v1 + eps))[None, :, None, None] \
        + be1[None, :, None, None]
    y = jnp.maximum(y, 0.0)
    y = lax.conv_general_dilated(y, w1, (1, 1), "VALID",
                                 dimension_numbers=("NCHW", "OIHW", "NCHW"))
    g2, be2, m2, v2 = bn2
    y = (y - m2[None, :, None, None]) * (g2 / jnp.sqrt(v2 + eps))[None, :, None, None] \
        + be2[None, :, None, None]
    y = jnp.maximum(y, 0.0)
    y = lax.conv_general_dilated(y, w2, (1, 1), ((1, 1), (1, 1)),
                                 dimension_numbers=("NCHW", "OIHW", "NCHW"))
    return y


if __name__ == "__main__":
    key = jax.random.PRNGKey(0)
    ks = jax.random.split(key, 12)

    B, H, W = 2, 16, 16
    growth_rate, expansion = 8, 4
    C_mid, C_out = expansion * growth_rate, growth_rate      # 32, 8

    # two incoming DenseNet feature maps; torch.cat gives C_in = 4
    f1 = jax.random.normal(ks[0], (B, 2, H, W), jnp.float32)
    f2 = jax.random.normal(ks[1], (B, 2, H, W), jnp.float32)
    C_in = 4

    w1 = jax.random.normal(ks[2], (C_mid, C_in, 1, 1), jnp.float32) * 0.3
    w2 = jax.random.normal(ks[3], (C_out, C_mid, 3, 3), jnp.float32) * 0.08

    def bn_params(kg, kb, km, kv, C):
        gamma = 1.0 + 0.1 * jax.random.normal(kg, (C,), jnp.float32)
        beta = 0.1 * jax.random.normal(kb, (C,), jnp.float32)
        mean = 0.1 * jax.random.normal(km, (C,), jnp.float32)
        var = jnp.abs(jax.random.normal(kv, (C,), jnp.float32)) + 0.5
        return gamma, beta, mean, var

    bn1 = bn_params(ks[4], ks[5], ks[6], ks[7], C_in)
    bn2 = bn_params(ks[8], ks[9], ks[10], ks[11], C_mid)

    ref = _ref_forward((f1, f2), w1, w2, bn1, bn2)

    # f32 MXU operands: tight numerical check against the reference.
    out_f32 = bottleneck_unit_forward((f1, f2), w1, w2, bn1, bn2,
                                      compute_dtype=jnp.float32)
    # fast path: bf16 MXU operands / intermediate, f32 accumulation+epilogues.
    out_bf16 = bottleneck_unit_forward((f1, f2), w1, w2, bn1, bn2,
                                       compute_dtype=jnp.bfloat16)
    jax.block_until_ready((out_f32, out_bf16))

    assert out_f32.shape == (B, C_out, H, W), out_f32.shape
    assert out_bf16.shape == (B, C_out, H, W), out_bf16.shape
    np.testing.assert_allclose(np.asarray(out_f32), np.asarray(ref),
                               rtol=5e-4, atol=5e-4)
    np.testing.assert_allclose(np.asarray(out_bf16), np.asarray(ref),
                               rtol=8e-2, atol=8e-2)
    print("KERNEL_OK")
</pallas_src>

<mosaic_0001>
module attributes {stable_mosaic.version = 11 : i64} {
  func.func @_stage1_kernel(%arg0: i32, %arg1: i32, %arg2: memref<1x8x16x128xf32, #tpu.memory_space<vmem>>, %arg3: memref<1x128xf32, #tpu.memory_space<vmem>>, %arg4: memref<1x128xf32, #tpu.memory_space<vmem>>, %arg5: memref<128x128xf32, #tpu.memory_space<vmem>>, %arg6: memref<1x128xf32, #tpu.memory_space<vmem>>, %arg7: memref<1x128xf32, #tpu.memory_space<vmem>>, %arg8: memref<1x8x16x128xf32, #tpu.memory_space<vmem>>) attributes {dimension_semantics = [#tpu.dimension_semantics<parallel>, #tpu.dimension_semantics<parallel>], iteration_bounds = array<i64: 2, 2>, scalar_prefetch = 0 : i64, scratch_operands = 0 : i64, tpu.core_type = #tpu.core_type<tc>, window_params = [{transform_indices = @transform_0, window_bounds = array<i64: 1, 8, 16, 128>}, {pipeline_mode = #tpu.pipeline_mode<synchronous>, transform_indices = @transform_1, window_bounds = array<i64: 1, 128>}, {pipeline_mode = #tpu.pipeline_mode<synchronous>, transform_indices = @transform_2, window_bounds = array<i64: 1, 128>}, {pipeline_mode = #tpu.pipeline_mode<synchronous>, transform_indices = @transform_3, window_bounds = array<i64: 128, 128>}, {pipeline_mode = #tpu.pipeline_mode<synchronous>, transform_indices = @transform_4, window_bounds = array<i64: 1, 128>}, {pipeline_mode = #tpu.pipeline_mode<synchronous>, transform_indices = @transform_5, window_bounds = array<i64: 1, 128>}, {transform_indices = @transform_6, window_bounds = array<i64: 1, 8, 16, 128>}]} {
    %c0 = arith.constant 0 : index
    %c0_0 = arith.constant 0 : index
    %c0_1 = arith.constant 0 : index
    %c0_2 = arith.constant 0 : index
    %0 = vector.load %arg2[%c0, %c0_0, %c0_1, %c0_2] : memref<1x8x16x128xf32, #tpu.memory_space<vmem>>, vector<1x8x16x128xf32>
    %1 = vector.shape_cast %0 : vector<1x8x16x128xf32> to vector<8x16x128xf32>
    %c0_3 = arith.constant 0 : index
    %c0_4 = arith.constant 0 : index
    %2 = vector.load %arg3[%c0_3, %c0_4] : memref<1x128xf32, #tpu.memory_space<vmem>>, vector<1x128xf32>
    %3 = vector.shape_cast %2 : vector<1x128xf32> to vector<128xf32>
    %4 = vector.shape_cast %3 : vector<128xf32> to vector<1x1x128xf32>
    %5 = vector.broadcast %4 : vector<1x1x128xf32> to vector<8x16x128xf32>
    %6 = arith.mulf %1, %5 : vector<8x16x128xf32>
    %c0_5 = arith.constant 0 : index
    %c0_6 = arith.constant 0 : index
    %7 = vector.load %arg4[%c0_5, %c0_6] : memref<1x128xf32, #tpu.memory_space<vmem>>, vector<1x128xf32>
    %8 = vector.shape_cast %7 : vector<1x128xf32> to vector<128xf32>
    %9 = vector.shape_cast %8 : vector<128xf32> to vector<1x1x128xf32>
    %10 = vector.broadcast %9 : vector<1x1x128xf32> to vector<8x16x128xf32>
    %11 = arith.addf %6, %10 : vector<8x16x128xf32>
    %cst = arith.constant 0.000000e+00 : f32
    %12 = vector.broadcast %cst : f32 to vector<8x16x128xf32>
    %13 = arith.maximumf %11, %12 : vector<8x16x128xf32>
    %14 = vector.shape_cast %13 : vector<8x16x128xf32> to vector<128x128xf32>
    %c0_7 = arith.constant 0 : index
    %c0_8 = arith.constant 0 : index
    %15 = vector.load %arg5[%c0_7, %c0_8] : memref<128x128xf32, #tpu.memory_space<vmem>>, vector<128x128xf32>
    %cst_9 = arith.constant dense<0.000000e+00> : vector<128x128xf32>
    %16 = tpu.matmul %14, %15, %cst_9 {dimension_numbers = #tpu.dot_dimension_numbers<[1], [0], [0], [1], [0, 0, 1, 1], [], []>} : vector<128x128xf32>, vector<128x128xf32>, vector<128x128xf32> -> vector<128x128xf32>
    %c0_10 = arith.constant 0 : index
    %c0_11 = arith.constant 0 : index
    %17 = vector.load %arg6[%c0_10, %c0_11] : memref<1x128xf32, #tpu.memory_space<vmem>>, vector<1x128xf32>
    %18 = vector.shape_cast %17 : vector<1x128xf32> to vector<128xf32>
    %19 = vector.shape_cast %18 : vector<128xf32> to vector<1x128xf32>
    %20 = vector.broadcast %19 : vector<1x128xf32> to vector<128x128xf32>
    %21 = arith.mulf %16, %20 : vector<128x128xf32>
    %c0_12 = arith.constant 0 : index
    %c0_13 = arith.constant 0 : index
    %22 = vector.load %arg7[%c0_12, %c0_13] : memref<1x128xf32, #tpu.memory_space<vmem>>, vector<1x128xf32>
    %23 = vector.shape_cast %22 : vector<1x128xf32> to vector<128xf32>
    %24 = vector.shape_cast %23 : vector<128xf32> to vector<1x128xf32>
    %25 = vector.broadcast %24 : vector<1x128xf32> to vector<128x128xf32>
    %26 = arith.addf %21, %25 : vector<128x128xf32>
    %cst_14 = arith.constant 0.000000e+00 : f32
    %27 = vector.broadcast %cst_14 : f32 to vector<128x128xf32>
    %28 = arith.maximumf %26, %27 : vector<128x128xf32>
    %29 = vector.shape_cast %28 : vector<128x128xf32> to vector<8x16x128xf32>
    %c0_15 = arith.constant 0 : index
    %c0_16 = arith.constant 0 : index
    %c0_17 = arith.constant 0 : index
    %c0_18 = arith.constant 0 : index
    %30 = vector.load %arg8[%c0_15, %c0_16, %c0_17, %c0_18] : memref<1x8x16x128xf32, #tpu.memory_space<vmem>>, vector<1x8x16x128xf32>
    %31 = vector.shape_cast %30 : vector<1x8x16x128xf32> to vector<8x16x128xf32>
    %32 = vector.shape_cast %29 : vector<8x16x128xf32> to vector<1x8x16x128xf32>
    tpu.vector_store %arg8[%c0_15, %c0_16, %c0_17, %c0_18], %32 {strides = array<i32>} : memref<1x8x16x128xf32, #tpu.memory_space<vmem>>, vector<1x8x16x128xf32>,
    return
  }
  func.func @transform_0(%arg0: i32, %arg1: i32) -> (i32, i32, i32, i32) {
    %c0_i32 = arith.constant 0 : i32
    %c0_i32_0 = arith.constant 0 : i32
    %c0_i32_1 = arith.constant 0 : i32
    return %arg0, %arg1, %c0_i32, %c0_i32_0 : i32, i32, i32, i32
  }
  func.func @transform_1(%arg0: i32, %arg1: i32) -> (i32, i32) {
    %c0_i32 = arith.constant 0 : i32
    %c0_i32_0 = arith.constant 0 : i32
    %c0_i32_1 = arith.constant 0 : i32
    return %c0_i32, %c0_i32_0 : i32, i32
  }
  func.func @transform_2(%arg0: i32, %arg1: i32) -> (i32, i32) {
    %c0_i32 = arith.constant 0 : i32
    %c0_i32_0 = arith.constant 0 : i32
    %c0_i32_1 = arith.constant 0 : i32
    return %c0_i32, %c0_i32_0 : i32, i32
  }
  func.func @transform_3(%arg0: i32, %arg1: i32) -> (i32, i32) {
    %c0_i32 = arith.constant 0 : i32
    %c0_i32_0 = arith.constant 0 : i32
    %c0_i32_1 = arith.constant 0 : i32
    return %c0_i32, %c0_i32_0 : i32, i32
  }
  func.func @transform_4(%arg0: i32, %arg1: i32) -> (i32, i32) {
    %c0_i32 = arith.constant 0 : i32
    %c0_i32_0 = arith.constant 0 : i32
    %c0_i32_1 = arith.constant 0 : i32
    return %c0_i32, %c0_i32_0 : i32, i32
  }
  func.func @transform_5(%arg0: i32, %arg1: i32) -> (i32, i32) {
    %c0_i32 = arith.constant 0 : i32
    %c0_i32_0 = arith.constant 0 : i32
    %c0_i32_1 = arith.constant 0 : i32
    return %c0_i32, %c0_i32_0 : i32, i32
  }
  func.func @transform_6(%arg0: i32, %arg1: i32) -> (i32, i32, i32, i32) {
    %c0_i32 = arith.constant 0 : i32
    %c0_i32_0 = arith.constant 0 : i32
    %c0_i32_1 = arith.constant 0 : i32
    return %arg0, %arg1, %c0_i32, %c0_i32_0 : i32, i32, i32, i32
  }
}

</mosaic_0001>

<llo_original>
// kernel: tpu_custom_call.1
$region0: #{tpu_custom_call.1}
  #allocation0 [shape = 'u32[]', space=smem, size = 0x4, offset = 0x4, fixed_abs, tag = 'smem constant byte address 0x4 - core index']
  #allocation1 [shape = 'u32[72,128]{1,0:T(1,128)}', space=vmem, size = 0x9000, scoped, tag = 'internal scratch']
  %s0 = inlined_call_operand.hbm [shape: f32[2,16,16,128], index: 0, kind: input, shape index: {}]
  %s1 = inlined_call_operand.hbm [shape: f32[1,128], index: 1, kind: input, shape index: {}]
  %s2 = inlined_call_operand.vmem [shape: f32[1,128], index: 2, kind: input, shape index: {}]
  %s3 = inlined_call_operand.hbm [shape: f32[128,128], index: 3, kind: input, shape index: {}]
  %s4 = inlined_call_operand.vmem [shape: f32[1,128], index: 4, kind: input, shape index: {}]
  %s5 = inlined_call_operand.vmem [shape: f32[1,128], index: 5, kind: input, shape index: {}]
  %s6 = inlined_call_operand.hbm [shape: f32[2,16,16,128], index: 6, kind: output, shape index: {}]
  %s7 = sld [smem:[#allocation0]]
  $region69: #{tpu_custom_call.1} parent=0
    _
  %s9 = ssub.s32 1, %s7
  %s10 = scalar_select 0, %s9, %s7
  $region1: #{tpu_custom_call.1} parent=0
    #allocation2 [shape = 'u8[131072]{0}', space=vmem, size = 0x20000, scoped, tag = 'input window, operand 0']
    #allocation3 [shape = 's32[2]{0}', space=sflag, size = 0x8, scoped, tag = 'scoped memory for tpu_custom_call.1']
    #allocation4 [shape = 's32[2]{0}', space=sflag, size = 0x8, scoped, tag = 'scoped memory for tpu_custom_call.1']
    #allocation5 [shape = 'u8[512]{0}', space=vmem, size = 0x400, scoped, tag = 'input window, operand 1, single buffered']
    #allocation6 [shape = 's32[1]{0}', space=sflag, size = 0x4, scoped, tag = 'scoped memory for tpu_custom_call.1']
    #allocation7 [shape = 'u8[65536]{0}', space=vmem, size = 0x10000, scoped, tag = 'input window, operand 3, single buffered']
    #allocation8 [shape = 'u8[131072]{0}', space=vmem, size = 0x20000, scoped, tag = 'output window, operand 0']
    %11 = vsyncpa [#allocation3], 0
    %s12 = scalar_lea.sflag [#allocation3], 1
    %13 = vsyncpa %s12, 0
    %14 = vsyncpa [#allocation6], 0
    %15 = vsyncpa [#allocation4], 0
    %s16 = scalar_lea.sflag [#allocation4], 1
    %17 = vsyncpa %s16, 0
    loop: start=0, step=1, limit=6
    $region2: #{tpu_custom_call.1} parent=1 // loop_pre_header
      _
    $region3: #{tpu_custom_call.1} parent=1 // loop_header
      %s19 = sphi 0, %s23
      %p20 = scmp.ge.s32.totalorder %s19, 6
      %s26 = sphi 0, %s38
      %s27 = sphi 0, %s34
      %s28 = sphi 0, %s26
      %s29 = sphi 0, %s27
      %s30 = sphi 0, %s28
      %s31 = sphi 0, %s29
      %s43 = sphi 0, %s45
      %s46 = sphi 0, %s43
      %s47 = sphi 0, %s46
      %s63 = sphi 0, %s47
      %s67 = sphi 0, %s67
      %s69 = sphi 0, %s67
      %s70 = sphi 0, %s69
      %s84 = sphi 0, %s70
      %s88 = sphi 0, %s88
      %s90 = sphi 0, %s88
      %s91 = sphi 0, %s90
      %s105 = sphi 0, %s91
      %s109 = sphi 0, %s109
      %s111 = sphi 0, %s109
      %s112 = sphi 0, %s111
      %s126 = sphi 0, %s112
      %s130 = sphi 0, %s130
      %s132 = sphi 0, %s130
      %s133 = sphi 0, %s132
      %s147 = sphi 0, %s133
      %s151 = sphi 0, %s151
      %s153 = sphi 0, %s151
      %s154 = sphi 0, %s153
      %s168 = sphi 0, %s154
      %s176 = sphi 0, %s178
      %s179 = sphi 0, %s176
      %s180 = sphi 0, %s179
      %s196 = sphi 0, %s180
    $region4: #{tpu_custom_call.1} parent=1 // loop_header_branch
      %22 = sbr.rel (%p20) target = $region8
    $region5: #{tpu_custom_call.1} parent=1 // loop_body
      %s24 = ssub.s32 %s19, 1
      %s25 = ssub.s32 %s19, 2
      %s32 = sadd.s32 1, %s27
      %p33 = scmp.ge.s32.totalorder %s32, 2
      %s34 = scalar_select %p33, 0, %s32
      %s35 = sadd.s32 1, %s26
      %s36 = scalar_select %p33, %s35, %s26
      %p37 = scmp.ge.s32.totalorder %s36, 2
      %s38 = scalar_select %p37, 0, %s36
      %s39 = ssub.s32 %s26, %s38
      %s40 = ssub.s32 %s27, %s34
      %s41 = sor.u32 %s39, %s40
      %p42 = scmp.eq.s32.totalorder %s41, 0
      %s44 = sadd.s32 %s43, 1
      %s45 = scalar_select %p42, %s43, %s44
      %p48 = pneg %p42
      %p49 = scmp.eq.s32.totalorder %s19, 3
      %p50 = por %p48, %p49
      %p51 = scmp.ne.s32.totalorder %s43, %s46
      %p52 = scmp.eq.s32.totalorder %s19, 0
      %p53 = por %p51, %p52
      %p54 = scmp.ne.s32.totalorder %s43, %s46
      %p55 = scmp.eq.s32.totalorder %s24, 3
      %p56 = por %p54, %p55
      %p57 = scmp.ne.s32.totalorder %s46, %s47
      %p58 = scmp.eq.s32.totalorder %s24, 0
      %p59 = por %p57, %p58
      %p60 = scmp.ne.s32.totalorder %s46, %s47
      %p61 = scmp.eq.s32.totalorder %s25, 3
      %p62 = por %p60, %p61
      %p64 = scmp.ne.s32.totalorder %s47, %s63
      %p65 = scmp.eq.s32.totalorder %s25, 0
      %p66 = por %p64, %p65
      %s68 = sadd.s32 %s67, 1
      %p71 = scmp.eq.s32.totalorder %s19, 3
      %p72 = scmp.ne.s32.totalorder %s67, %s69
      %p73 = scmp.eq.s32.totalorder %s19, 0
      %p74 = por %p72, %p73
      %p75 = scmp.ne.s32.totalorder %s67, %s69
      %p76 = scmp.eq.s32.totalorder %s24, 3
      %p77 = por %p75, %p76
      %p78 = scmp.ne.s32.totalorder %s69, %s70
      %p79 = scmp.eq.s32.totalorder %s24, 0
      %p80 = por %p78, %p79
      %p81 = scmp.ne.s32.totalorder %s69, %s70
      %p82 = scmp.eq.s32.totalorder %s25, 3
      %p83 = por %p81, %p82
      %p85 = scmp.ne.s32.totalorder %s70, %s84
      %p86 = scmp.eq.s32.totalorder %s25, 0
      %p87 = por %p85, %p86
      %s89 = sadd.s32 %s88, 1
      %p92 = scmp.eq.s32.totalorder %s19, 3
      %p93 = scmp.ne.s32.totalorder %s88, %s90
      %p94 = scmp.eq.s32.totalorder %s19, 0
      %p95 = por %p93, %p94
      %p96 = scmp.ne.s32.totalorder %s88, %s90
      %p97 = scmp.eq.s32.totalorder %s24, 3
      %p98 = por %p96, %p97
      %p99 = scmp.ne.s32.totalorder %s90, %s91
      %p100 = scmp.eq.s32.totalorder %s24, 0
      %p101 = por %p99, %p100
      %p102 = scmp.ne.s32.totalorder %s90, %s91
      %p103 = scmp.eq.s32.totalorder %s25, 3
      %p104 = por %p102, %p103
      %p106 = scmp.ne.s32.totalorder %s91, %s105
      %p107 = scmp.eq.s32.totalorder %s25, 0
      %p108 = por %p106, %p107
      %s110 = sadd.s32 %s109, 1
      %p113 = scmp.eq.s32.totalorder %s19, 3
      %p114 = scmp.ne.s32.totalorder %s109, %s111
      %p115 = scmp.eq.s32.totalorder %s19, 0
      %p116 = por %p114, %p115
      %p117 = scmp.ne.s32.totalorder %s109, %s111
      %p118 = scmp.eq.s32.totalorder %s24, 3
      %p119 = por %p117, %p118
      %p120 = scmp.ne.s32.totalorder %s111, %s112
      %p121 = scmp.eq.s32.totalorder %s24, 0
      %p122 = por %p120, %p121
      %p123 = scmp.ne.s32.totalorder %s111, %s112
      %p124 = scmp.eq.s32.totalorder %s25, 3
      %p125 = por %p123, %p124
      %p127 = scmp.ne.s32.totalorder %s112, %s126
      %p128 = scmp.eq.s32.totalorder %s25, 0
      %p129 = por %p127, %p128
      %s131 = sadd.s32 %s130, 1
      %p134 = scmp.eq.s32.totalorder %s19, 3
      %p135 = scmp.ne.s32.totalorder %s130, %s132
      %p136 = scmp.eq.s32.totalorder %s19, 0
      %p137 = por %p135, %p136
      %p138 = scmp.ne.s32.totalorder %s130, %s132
      %p139 = scmp.eq.s32.totalorder %s24, 3
      %p140 = por %p138, %p139
      %p141 = scmp.ne.s32.totalorder %s132, %s133
      %p142 = scmp.eq.s32.totalorder %s24, 0
      %p143 = por %p141, %p142
      %p144 = scmp.ne.s32.totalorder %s132, %s133
      %p145 = scmp.eq.s32.totalorder %s25, 3
      %p146 = por %p144, %p145
      %p148 = scmp.ne.s32.totalorder %s133, %s147
      %p149 = scmp.eq.s32.totalorder %s25, 0
      %p150 = por %p148, %p149
      %s152 = sadd.s32 %s151, 1
      %p155 = scmp.eq.s32.totalorder %s19, 3
      %p156 = scmp.ne.s32.totalorder %s151, %s153
      %p157 = scmp.eq.s32.totalorder %s19, 0
      %p158 = por %p156, %p157
      %p159 = scmp.ne.s32.totalorder %s151, %s153
      %p160 = scmp.eq.s32.totalorder %s24, 3
      %p161 = por %p159, %p160
      %p162 = scmp.ne.s32.totalorder %s153, %s154
      %p163 = scmp.eq.s32.totalorder %s24, 0
      %p164 = por %p162, %p163
      %p165 = scmp.ne.s32.totalorder %s153, %s154
      %p166 = scmp.eq.s32.totalorder %s25, 3
      %p167 = por %p165, %p166
      %p169 = scmp.ne.s32.totalorder %s154, %s168
      %p170 = scmp.eq.s32.totalorder %s25, 0
      %p171 = por %p169, %p170
      %s172 = ssub.s32 %s26, %s38
      %s173 = ssub.s32 %s27, %s34
      %s174 = sor.u32 %s172, %s173
      %p175 = scmp.eq.s32.totalorder %s174, 0
      %s177 = sadd.s32 %s176, 1
      %s178 = scalar_select %p175, %s176, %s177
      %p181 = pneg %p175
      %p182 = scmp.eq.s32.totalorder %s19, 3
      %p183 = por %p181, %p182
      %p184 = scmp.ne.s32.totalorder %s176, %s179
      %p185 = scmp.eq.s32.totalorder %s19, 0
      %p186 = por %p184, %p185
      %p187 = scmp.ne.s32.totalorder %s176, %s179
      %p188 = scmp.eq.s32.totalorder %s24, 3
      %p189 = por %p187, %p188
      %p190 = scmp.ne.s32.totalorder %s179, %s180
      %p191 = scmp.eq.s32.totalorder %s24, 0
      %p192 = por %p190, %p191
      %p193 = scmp.ne.s32.totalorder %s179, %s180
      %p194 = scmp.eq.s32.totalorder %s25, 3
      %p195 = por %p193, %p194
      %p197 = scmp.ne.s32.totalorder %s180, %s196
      %p198 = scmp.eq.s32.totalorder %s25, 0
      %p199 = por %p197, %p198
      %p200 = scmp.le.s32.totalorder 1, %s19
      %p201 = scmp.lt.s32.totalorder %s19, 5
      %p202 = pnand %p200, %p201
      %p203 = pneg %p202
      // Predicated region
      $region9: #{tpu_custom_call.1} parent=5 // pred_check
        _
      $region10: #{tpu_custom_call.1} parent=5 // pred_check_branch
        %205 = sbr.rel (%p202) target = $region12
      $region11: #{tpu_custom_call.1} parent=5 // pred_region
        %s206 = ssub.s32 %s19, 1
        // Predicated region
        $region13: #{tpu_custom_call.1} parent=11 // pred_check
          %p207 = pneg %p80
        $region14: #{tpu_custom_call.1} parent=11 // pred_check_branch
          %209 = sbr.rel (%p207) target = $region16
        $region15: #{tpu_custom_call.1} parent=11 // pred_region
          %211 = vsyncadd [#allocation6], 0
          %s213 = sshll.u32 %s1, 4
          %s214 = int_to_ptr.hbm [resolvable:$true] %s213
          %s215 = sshll.u32 [#allocation5], 4
          %s216 = int_to_ptr.vmem [resolvable:$true] %s215
          %218 = dma.hbm_to_vmem [thread:$0]  %s214, 16, %s216, [#allocation6]
        $region16: #{tpu_custom_call.1} parent=11 // pred_fallthru
          _
        // Predicated region
        $region17: #{tpu_custom_call.1} parent=11 // pred_check
          %p219 = pneg %p101
        $region18: #{tpu_custom_call.1} parent=11 // pred_check_branch
          %221 = sbr.rel (%p219) target = $region20
        $region19: #{tpu_custom_call.1} parent=11 // pred_region
          _
        $region20: #{tpu_custom_call.1} parent=11 // pred_fallthru
          _
        // Predicated region
        $region21: #{tpu_custom_call.1} parent=11 // pred_check
          %p222 = pneg %p122
        $region22: #{tpu_custom_call.1} parent=11 // pred_check_branch
          %224 = sbr.rel (%p222) target = $region24
        $region23: #{tpu_custom_call.1} parent=11 // pred_region
          %226 = vsyncadd [#allocation6], 0
          %s227 = sshll.u32 %s3, 4
          %s228 = int_to_ptr.hbm [resolvable:$true] %s227
          %s229 = sshll.u32 [#allocation7], 4
          %s230 = int_to_ptr.vmem [resolvable:$true] %s229
          %235 = dma.hbm_to_vmem [thread:$0]  %s228, 2048, %s230, [#allocation6], 128, 128, 8
        $region24: #{tpu_custom_call.1} parent=11 // pred_fallthru
          _
        // Predicated region
        $region25: #{tpu_custom_call.1} parent=11 // pred_check
          %p236 = pneg %p143
        $region26: #{tpu_custom_call.1} parent=11 // pred_check_branch
          %238 = sbr.rel (%p236) target = $region28
        $region27: #{tpu_custom_call.1} parent=11 // pred_region
          _
        $region28: #{tpu_custom_call.1} parent=11 // pred_fallthru
          _
        // Predicated region
        $region29: #{tpu_custom_call.1} parent=11 // pred_check
          %p239 = pneg %p164
        $region30: #{tpu_custom_call.1} parent=11 // pred_check_branch
          %241 = sbr.rel (%p239) target = $region32
        $region31: #{tpu_custom_call.1} parent=11 // pred_region
          _
        $region32: #{tpu_custom_call.1} parent=11 // pred_fallthru
          _
      $region12: #{tpu_custom_call.1} parent=5 // pred_fallthru
        _
      %p242 = scmp.lt.s32.totalorder %s19, 4
      // Predicated region
      $region33: #{tpu_custom_call.1} parent=5 // pred_check
        %p243 = pneg %p242
      $region34: #{tpu_custom_call.1} parent=5 // pred_check_branch
        %245 = sbr.rel (%p243) target = $region36
      $region35: #{tpu_custom_call.1} parent=5 // pred_region
        // Predicated region
        $region37: #{tpu_custom_call.1} parent=35 // pred_check
          %p246 = pneg %p53
        $region38: #{tpu_custom_call.1} parent=35 // pred_check_branch
          %248 = sbr.rel (%p246) target = $region40
        $region39: #{tpu_custom_call.1} parent=35 // pred_region
          %s249 = sand.u32 %s43, 1
          %s250 = scalar_lea.sflag [#allocation3], %s249
          %s251 = sand.u32 %s43, 1
          %s252 = smul.addr %s251, 128
          %s253 = scalar_lea.vmem [#allocation2], %s252
          %s254 = smul.u32 8, %s27
          %256 = vsyncadd %s250, 0
          %s257 = smul.addr %s254, 2
          %s258 = smul.addr %s26, 32
          %s259 = sadd.s32 %s257, %s258
          %s260 = smul.addr %s259, 8
          %s261 = scalar_lea.hbm %s0, %s260
          %s262 = sshll.u32 %s261, 4
          %s263 = int_to_ptr.hbm [resolvable:$true] %s262
          %s264 = sshll.u32 %s253, 4
          %s265 = int_to_ptr.vmem [resolvable:$true] %s264
          %270 = dma.hbm_to_vmem [thread:$0]  %s263, 2048, %s265, %s250, 128, 128, 8
        $region40: #{tpu_custom_call.1} parent=35 // pred_fallthru
          _
      $region36: #{tpu_custom_call.1} parent=5 // pred_fallthru
        _
      %p271 = scmp.le.s32.totalorder 1, %s19
      %p272 = scmp.lt.s32.totalorder %s19, 5
      %p273 = pnand %p271, %p272
      %p274 = pneg %p273
      // Predicated region
      $region41: #{tpu_custom_call.1} parent=5 // pred_check
        _
      $region42: #{tpu_custom_call.1} parent=5 // pred_check_branch
        %276 = sbr.rel (%p273) target = $region44
      $region43: #{tpu_custom_call.1} parent=5 // pred_region
        %s277 = ssub.s32 %s19, 1
        %s278 = sand.u32 %s46, 1
        %s279 = scalar_lea.sflag [#allocation3], %s278
        %s280 = sand.u32 %s46, 1
        %s281 = smul.addr %s280, 128
        %s282 = scalar_lea.vmem [#allocation2], %s281
        // Predicated region
        $region45: #{tpu_custom_call.1} parent=43 // pred_check
          %p283 = pneg %p59
        $region46: #{tpu_custom_call.1} parent=43 // pred_check_branch
          %285 = sbr.rel (%p283) target = $region48
        $region47: #{tpu_custom_call.1} parent=43 // pred_region
          %287 = dma.done %s279, 2048
        $region48: #{tpu_custom_call.1} parent=43 // pred_fallthru
          _
        // Predicated region
        $region49: #{tpu_custom_call.1} parent=43 // pred_check
          %p288 = pneg %p80
        $region50: #{tpu_custom_call.1} parent=43 // pred_check_branch
          %290 = sbr.rel (%p288) target = $region52
        $region51: #{tpu_custom_call.1} parent=43 // pred_region
          %292 = dma.done [#allocation6], 16
        $region52: #{tpu_custom_call.1} parent=43 // pred_fallthru
          _
        // Predicated region
        $region53: #{tpu_custom_call.1} parent=43 // pred_check
          %p293 = pneg %p122
        $region54: #{tpu_custom_call.1} parent=43 // pred_check_branch
          %295 = sbr.rel (%p293) target = $region56
        $region55: #{tpu_custom_call.1} parent=43 // pred_region
          %297 = dma.done [#allocation6], 2048
        $region56: #{tpu_custom_call.1} parent=43 // pred_fallthru
          _
        %s298 = sand.u32 %s46, 1
        %s299 = scalar_lea.sflag [#allocation3], %s298
        %s300 = sand.u32 %s46, 1
        %s301 = smul.addr %s300, 128
        %s302 = scalar_lea.vmem [#allocation2], %s301
        %p303 = pneg %p59
        %p304 = pneg %p56
        %p305 = pneg %p80
        %p306 = pneg %p77
        %p307 = pneg %p101
        %p308 = pneg %p98
        %p309 = pneg %p122
        %p310 = pneg %p119
        %p311 = pneg %p143
        %p312 = pneg %p140
        %p313 = pneg %p164
        %p314 = pneg %p161
        %p315 = pneg %p192
        %p316 = pneg %p189
        %s317 = sand.u32 %s179, 1
        %s318 = scalar_lea.sflag [#allocation4], %s317
        %s319 = sand.u32 %s179, 1
        %s320 = smul.addr %s319, 128
        %s321 = scalar_lea.vmem [#allocation8], %s320
        %s322 = smul.u32 8, %s29
        %s323 = smul.u32 8, %s29
        %v324 = vld [vmem:[%s282] sm:$0xff]
        %v325 = vld [vmem:[%s282 + $0x8] sm:$0xff]
        %v326 = vld [vmem:[%s282 + $0x10] sm:$0xff]
        %v327 = vld [vmem:[%s282 + $0x18] sm:$0xff]
        %v328 = vld [vmem:[%s282 + $0x20] sm:$0xff]
        %v329 = vld [vmem:[%s282 + $0x28] sm:$0xff]
        %v330 = vld [vmem:[%s282 + $0x30] sm:$0xff]
        %v331 = vld [vmem:[%s282 + $0x38] sm:$0xff]
        %v332 = vld [vmem:[%s282 + $0x40] sm:$0xff]
        %v333 = vld [vmem:[%s282 + $0x48] sm:$0xff]
        %v334 = vld [vmem:[%s282 + $0x50] sm:$0xff]
        %v335 = vld [vmem:[%s282 + $0x58] sm:$0xff]
        %v336 = vld [vmem:[%s282 + $0x60] sm:$0xff]
        %v337 = vld [vmem:[%s282 + $0x68] sm:$0xff]
        %v338 = vld [vmem:[%s282 + $0x70] sm:$0xff]
        %v339 = vld [vmem:[%s282 + $0x78] sm:$0xff]
        %v340 = vld [vmem:[#allocation5] sm:$0x1]
        %v342 = vperm.slane %v340, 0
        %v344 = vmul.f32 %v324, %v342
        %v345 = vmul.f32 %v325, %v342
        %v346 = vmul.f32 %v326, %v342
        %v347 = vmul.f32 %v327, %v342
        %v348 = vmul.f32 %v328, %v342
        %v349 = vmul.f32 %v329, %v342
        %v350 = vmul.f32 %v330, %v342
        %v351 = vmul.f32 %v331, %v342
        %v352 = vmul.f32 %v332, %v342
        %v353 = vmul.f32 %v333, %v342
        %v354 = vmul.f32 %v334, %v342
        %v355 = vmul.f32 %v335, %v342
        %v356 = vmul.f32 %v336, %v342
        %v357 = vmul.f32 %v337, %v342
        %v358 = vmul.f32 %v338, %v342
        %v359 = vmul.f32 %v339, %v342
        %v360 = vld [vmem:[%s2] sm:$0x1]
        %v362 = vperm.slane %v360, 0
        %v364 = vadd.f32 %v344, %v362
        %v365 = vadd.f32 %v345, %v362
        %v366 = vadd.f32 %v346, %v362
        %v367 = vadd.f32 %v347, %v362
        %v368 = vadd.f32 %v348, %v362
        %v369 = vadd.f32 %v349, %v362
        %v370 = vadd.f32 %v350, %v362
        %v371 = vadd.f32 %v351, %v362
        %v372 = vadd.f32 %v352, %v362
        %v373 = vadd.f32 %v353, %v362
        %v374 = vadd.f32 %v354, %v362
        %v375 = vadd.f32 %v355, %v362
        %v376 = vadd.f32 %v356, %v362
        %v377 = vadd.f32 %v357, %v362
        %v378 = vadd.f32 %v358, %v362
        %v379 = vadd.f32 %v359, %v362
        %v380 = vmax.f32 %v364, 0.0
        %v381 = vmax.f32 %v365, 0.0
        %v382 = vmax.f32 %v366, 0.0
        %v383 = vmax.f32 %v367, 0.0
        %v384 = vmax.f32 %v368, 0.0
        %v385 = vmax.f32 %v369, 0.0
        %v386 = vmax.f32 %v370, 0.0
        %v387 = vmax.f32 %v371, 0.0
        %v388 = vmax.f32 %v372, 0.0
        %v389 = vmax.f32 %v373, 0.0
        %v390 = vmax.f32 %v374, 0.0
        %v391 = vmax.f32 %v375, 0.0
        %v392 = vmax.f32 %v376, 0.0
        %v393 = vmax.f32 %v377, 0.0
        %v394 = vmax.f32 %v378, 0.0
        %v395 = vmax.f32 %v379, 0.0
        %v396 = vld [vmem:[#allocation7] sm:$0xff]
        %v397 = vld [vmem:[#allocation7 + $0x8] sm:$0xff]
        %v398 = vld [vmem:[#allocation7 + $0x10] sm:$0xff]
        %v399 = vld [vmem:[#allocation7 + $0x18] sm:$0xff]
        %v400 = vld [vmem:[#allocation7 + $0x20] sm:$0xff]
        %v401 = vld [vmem:[#allocation7 + $0x28] sm:$0xff]
        %v402 = vld [vmem:[#allocation7 + $0x30] sm:$0xff]
        %v403 = vld [vmem:[#allocation7 + $0x38] sm:$0xff]
        %v404 = vld [vmem:[#allocation7 + $0x40] sm:$0xff]
        %v405 = vld [vmem:[#allocation7 + $0x48] sm:$0xff]
        %v406 = vld [vmem:[#allocation7 + $0x50] sm:$0xff]
        %v407 = vld [vmem:[#allocation7 + $0x58] sm:$0xff]
        %v408 = vld [vmem:[#allocation7 + $0x60] sm:$0xff]
        %v409 = vld [vmem:[#allocation7 + $0x68] sm:$0xff]
        %v410 = vld [vmem:[#allocation7 + $0x70] sm:$0xff]
        %v411 = vld [vmem:[#allocation7 + $0x78] sm:$0xff]
        %412 = vmatpush.msra.mxu0 %v411
        %413 = vmatpush.msra.mxu0 %v410
        %414 = vmatpush.msra.mxu0 %v409
        %415 = vmatpush.msra.mxu0 %v408
        %416 = vmatpush.msra.mxu0 %v407
        %417 = vmatpush.msra.mxu0 %v406
        %418 = vmatpush.msra.mxu0 %v405
        %419 = vmatpush.msra.mxu0 %v404
        %420 = vmatpush.msra.mxu0 %v403
        %421 = vmatpush.msra.mxu0 %v402
        %422 = vmatpush.msra.mxu0 %v401
        %423 = vmatpush.msra.mxu0 %v400
        %424 = vmatpush.msra.mxu0 %v399
        %425 = vmatpush.msra.mxu0 %v398
        %426 = vmatpush.msra.mxu0 %v397
        %427 = vmatpush.msra.mxu0 %v396
        %428 = vmatmul.f32.gmra.mxu0 %v380
        %v429 = vpop.f32.mrf.mxu0
        %v430 = vadd.f32 0.0, %v429
        %431 = vmatmul.f32.gmra.mxu0 %v381
        %v432 = vpop.f32.mrf.mxu0
        %v433 = vadd.f32 0.0, %v432
        %434 = vmatmul.f32.gmra.mxu0 %v382
        %v435 = vpop.f32.mrf.mxu0
        %v436 = vadd.f32 0.0, %v435
        %437 = vmatmul.f32.gmra.mxu0 %v383
        %v438 = vpop.f32.mrf.mxu0
        %v439 = vadd.f32 0.0, %v438
        %440 = vmatmul.f32.gmra.mxu0 %v384
        %v441 = vpop.f32.mrf.mxu0
        %v442 = vadd.f32 0.0, %v441
        %443 = vmatmul.f32.gmra.mxu0 %v385
        %v444 = vpop.f32.mrf.mxu0
        %v445 = vadd.f32 0.0, %v444
        %446 = vmatmul.f32.gmra.mxu0 %v386
        %v447 = vpop.f32.mrf.mxu0
        %v448 = vadd.f32 0.0, %v447
        %449 = vmatmul.f32.gmra.mxu0 %v387
        %v450 = vpop.f32.mrf.mxu0
        %v451 = vadd.f32 0.0, %v450
        %452 = vmatmul.f32.gmra.mxu0 %v388
        %v453 = vpop.f32.mrf.mxu0
        %v454 = vadd.f32 0.0, %v453
        %455 = vmatmul.f32.gmra.mxu0 %v389
        %v456 = vpop.f32.mrf.mxu0
        %v457 = vadd.f32 0.0, %v456
        %458 = vmatmul.f32.gmra.mxu0 %v390
        %v459 = vpop.f32.mrf.mxu0
        %v460 = vadd.f32 0.0, %v459
        %461 = vmatmul.f32.gmra.mxu0 %v391
        %v462 = vpop.f32.mrf.mxu0
        %v463 = vadd.f32 0.0, %v462
        %464 = vmatmul.f32.gmra.mxu0 %v392
        %v465 = vpop.f32.mrf.mxu0
        %v466 = vadd.f32 0.0, %v465
        %467 = vmatmul.f32.gmra.mxu0 %v393
        %v468 = vpop.f32.mrf.mxu0
        %v469 = vadd.f32 0.0, %v468
        %470 = vmatmul.f32.gmra.mxu0 %v394
        %v471 = vpop.f32.mrf.mxu0
        %v472 = vadd.f32 0.0, %v471
        %473 = vmatmul.f32.gmra.mxu0 %v395
        %v474 = vpop.f32.mrf.mxu0
        %v475 = vadd.f32 0.0, %v474
        %476 = vdwg.mxu0
        %v477 = vld [vmem:[%s4] sm:$0x1]
        %v479 = vperm.slane %v477, 0
        %v481 = vmul.f32 %v430, %v479
        %v482 = vmul.f32 %v433, %v479
        %v483 = vmul.f32 %v436, %v479
        %v484 = vmul.f32 %v439, %v479
        %v485 = vmul.f32 %v442, %v479
        %v486 = vmul.f32 %v445, %v479
        %v487 = vmul.f32 %v448, %v479
        %v488 = vmul.f32 %v451, %v479
        %v489 = vmul.f32 %v454, %v479
        %v490 = vmul.f32 %v457, %v479
        %v491 = vmul.f32 %v460, %v479
        %v492 = vmul.f32 %v463, %v479
        %v493 = vmul.f32 %v466, %v479
        %v494 = vmul.f32 %v469, %v479
        %v495 = vmul.f32 %v472, %v479
        %v496 = vmul.f32 %v475, %v479
        %v497 = vld [vmem:[%s5] sm:$0x1]
        %v499 = vperm.slane %v497, 0
        %v501 = vadd.f32 %v481, %v499
        %v502 = vadd.f32 %v482, %v499
        %v503 = vadd.f32 %v483, %v499
        %v504 = vadd.f32 %v484, %v499
        %v505 = vadd.f32 %v485, %v499
        %v506 = vadd.f32 %v486, %v499
        %v507 = vadd.f32 %v487, %v499
        %v508 = vadd.f32 %v488, %v499
        %v509 = vadd.f32 %v489, %v499
        %v510 = vadd.f32 %v490, %v499
        %v511 = vadd.f32 %v491, %v499
        %v512 = vadd.f32 %v492, %v499
        %v513 = vadd.f32 %v493, %v499
        %v514 = vadd.f32 %v494, %v499
        %v515 = vadd.f32 %v495, %v499
        %v516 = vadd.f32 %v496, %v499
        %v517 = vmax.f32 %v501, 0.0
        %v518 = vmax.f32 %v502, 0.0
        %v519 = vmax.f32 %v503, 0.0
        %v520 = vmax.f32 %v504, 0.0
        %v521 = vmax.f32 %v505, 0.0
        %v522 = vmax.f32 %v506, 0.0
        %v523 = vmax.f32 %v507, 0.0
        %v524 = vmax.f32 %v508, 0.0
        %v525 = vmax.f32 %v509, 0.0
        %v526 = vmax.f32 %v510, 0.0
        %v527 = vmax.f32 %v511, 0.0
        %v528 = vmax.f32 %v512, 0.0
        %v529 = vmax.f32 %v513, 0.0
        %v530 = vmax.f32 %v514, 0.0
        %v531 = vmax.f32 %v515, 0.0
        %v532 = vmax.f32 %v516, 0.0
        %533 = vst [vmem:[%s321] sm:$0xff] %v517
        %534 = vst [vmem:[%s321 + $0x8] sm:$0xff] %v518
        %535 = vst [vmem:[%s321 + $0x10] sm:$0xff] %v519
        %536 = vst [vmem:[%s321 + $0x18] sm:$0xff] %v520
        %537 = vst [vmem:[%s321 + $0x20] sm:$0xff] %v521
        %538 = vst [vmem:[%s321 + $0x28] sm:$0xff] %v522
        %539 = vst [vmem:[%s321 + $0x30] sm:$0xff] %v523
        %540 = vst [vmem:[%s321 + $0x38] sm:$0xff] %v524
        %541 = vst [vmem:[%s321 + $0x40] sm:$0xff] %v525
        %542 = vst [vmem:[%s321 + $0x48] sm:$0xff] %v526
        %543 = vst [vmem:[%s321 + $0x50] sm:$0xff] %v527
        %544 = vst [vmem:[%s321 + $0x58] sm:$0xff] %v528
        %545 = vst [vmem:[%s321 + $0x60] sm:$0xff] %v529
        %546 = vst [vmem:[%s321 + $0x68] sm:$0xff] %v530
        %547 = vst [vmem:[%s321 + $0x70] sm:$0xff] %v531
        %548 = vst [vmem:[%s321 + $0x78] sm:$0xff] %v532
        %s549 = sand.u32 %s179, 1
        %s550 = scalar_lea.sflag [#allocation4], %s549
        %s551 = sand.u32 %s179, 1
        %s552 = smul.addr %s551, 128
        %s553 = scalar_lea.vmem [#allocation8], %s552
        // Predicated region
        $region57: #{tpu_custom_call.1} parent=43 // pred_check
          %p554 = pneg %p189
        $region58: #{tpu_custom_call.1} parent=43 // pred_check_branch
          %556 = sbr.rel (%p554) target = $region60
        $region59: #{tpu_custom_call.1} parent=43 // pred_region
          %s557 = smul.u32 8, %s29
          %559 = vsyncadd %s550, 0
          %s560 = smul.addr %s557, 2
          %s561 = smul.addr %s28, 32
          %s562 = sadd.s32 %s560, %s561
          %s563 = smul.addr %s562, 8
          %s564 = scalar_lea.hbm %s6, %s563
          %s565 = sshll.u32 %s553, 4
          %s566 = int_to_ptr.vmem [resolvable:$true] %s565
          %s567 = sshll.u32 %s564, 4
          %s568 = int_to_ptr.hbm [resolvable:$true] %s567
          %573 = dma.vmem_to_hbm [thread:$0]  %s566, 2048, %s568, %s550, 128, 128, 8
        $region60: #{tpu_custom_call.1} parent=43 // pred_fallthru
          _
      $region44: #{tpu_custom_call.1} parent=5 // pred_fallthru
        _
      %p574 = scmp.le.s32.totalorder 2, %s19
      // Predicated region
      $region61: #{tpu_custom_call.1} parent=5 // pred_check
        %p575 = pneg %p574
      $region62: #{tpu_custom_call.1} parent=5 // pred_check_branch
        %577 = sbr.rel (%p575) target = $region64
      $region63: #{tpu_custom_call.1} parent=5 // pred_region
        %s578 = ssub.s32 %s19, 2
        // Predicated region
        $region65: #{tpu_custom_call.1} parent=63 // pred_check
          %p579 = pneg %p195
        $region66: #{tpu_custom_call.1} parent=63 // pred_check_branch
          %581 = sbr.rel (%p579) target = $region68
        $region67: #{tpu_custom_call.1} parent=63 // pred_region
          %s582 = sand.u32 %s180, 1
          %s583 = scalar_lea.sflag [#allocation4], %s582
          %s584 = sand.u32 %s180, 1
          %s585 = smul.addr %s584, 128
          %s586 = scalar_lea.vmem [#allocation8], %s585
          %588 = dma.done %s583, 2048
        $region68: #{tpu_custom_call.1} parent=63 // pred_fallthru
          _
      $region64: #{tpu_custom_call.1} parent=5 // pred_fallthru
        _
    $region6: #{tpu_custom_call.1} parent=1 // loop_footer
      %s23 = sadd.s32 1, %s19
    $region7: #{tpu_custom_call.1} parent=1 // loop_footer_branch
      %18 = sbr.rel target = $region3
    $region8: #{tpu_custom_call.1} parent=1 // loop_exit
      _
    %589 = vsyncpa [#allocation3], 1
    %s590 = scalar_lea.sflag [#allocation3], 1
    %591 = vsyncpa %s590, 1
    %592 = vsyncpa [#allocation6], 1
    %593 = vsyncpa [#allocation4], 1
    %s594 = scalar_lea.sflag [#allocation4], 1
    %595 = vsyncpa %s594, 1

</llo_original>
